<compile_context>
chip_gen: v7x
topology: tpu7x:2x2x1
jax: 0.10.0
libtpu: 0.0.40
codegen_flags: <defaults>
</compile_context>

<pallas_src>
import functools

import jax
import jax.numpy as jnp
import numpy as np
from jax.experimental import pallas as pl
from jax.experimental.pallas import tpu as pltpu


def _kmeans_kernel(xT_ref, idx_ref, w1_ref, tab_ref, cent_ref,
                   c2_ref, w2c_ref, b2_ref, out_ref):
    # ---- embed: h.T = W1 @ x_cont.T + (cat_embed[idx] + b1).T  -> [D, TM]
    h = jnp.dot(w1_ref[...], xT_ref[...],
                preferred_element_type=jnp.float32)          # [D, TM]

    # In-kernel embedding gather via one-hot matmul against the resident
    # table (Linear bias b1 already folded into the table rows).
    idx = idx_ref[...]                                       # [1, TM] int32
    V = tab_ref.shape[1]
    TM = idx.shape[1]
    rows = jax.lax.broadcasted_iota(jnp.int32, (V, TM), 0)   # [V, TM]
    one_hot = (rows == idx).astype(jnp.float32)              # [V, TM]
    h = h + jnp.dot(tab_ref[...], one_hot,
                    preferred_element_type=jnp.float32)      # [D, TM]

    # ---- cdist (p=2) to centroids, expanded form: [C, TM]
    # NOTE: x2 + c2 - 2*x.c can cancel for points very near a centroid; the
    # clamp prevents NaNs and the forward tolerance absorbs the error.
    x2 = jnp.sum(h * h, axis=0, keepdims=True)               # [1, TM]
    xc = jnp.dot(cent_ref[...], h,
                 preferred_element_type=jnp.float32)         # [C, TM]
    d = jnp.sqrt(jnp.maximum(x2 + c2_ref[...] - 2.0 * xc, 0.0))

    # ---- softmax(-d) over clusters with DEFERRED normalization
    neg = -d
    m = jnp.max(neg, axis=0, keepdims=True)                  # [1, TM]
    e = jnp.exp(neg - m)                                     # [C, TM]
    s = jnp.sum(e, axis=0, keepdims=True)                    # [1, TM]

    # ---- fused (softmax @ centroids / sqrt(D)) @ W2 + b2 as one GEMV:
    # w2c = embed2_w @ centroids.T / sqrt(D)  ([1, C], precomputed).
    t = jnp.dot(w2c_ref[...], e,
                preferred_element_type=jnp.float32)          # [1, TM]
    out_ref[...] = t * pl.reciprocal(s, approx=True) + b2_ref[...]


def _round_up(a, b):
    return ((a + b - 1) // b) * b


@functools.partial(jax.jit,
                   static_argnames=("num_dim", "pred_len", "target_tile"))
def trainable_kmeans_forward(x, params, *, num_dim, pred_len=None, y=None,
                             target_tile=4096):
    """Forward pass of TrainableKMeans. Returns (output2, loss)."""
    B, S, F = x.shape
    n = B * S

    # Adaptive tile: multiple of 128, capped by target, and sized so that
    # (when possible) the grid has >= 2 steps to feed both v7x TensorCores.
    row_tile = min(int(target_tile), _round_up(-(-n // 2), 128))
    row_tile = max(row_tile, 128)
    n_tiles = -(-n // row_tile)                 # cdiv
    n_pad = n_tiles * row_tile

    # --- plain-JAX glue (fused into this jit): flatten, pad, lane-major ---
    x_cont = x[:, :, :-1].reshape(n, F - 1).astype(jnp.float32)   # [n, F-1]
    x_idx = x[:, :, -1].reshape(n).astype(jnp.int32)              # [n]
    pad = n_pad - n
    if pad:
        x_cont = jnp.pad(x_cont, ((0, pad), (0, 0)))
        x_idx = jnp.pad(x_idx, ((0, pad),))
    xT = x_cont.T                                                 # [F-1, n_pad]
    idx2d = x_idx[None, :]                                        # [1, n_pad]

    # --- grid-invariant params, precomputed once ---
    w1 = params["embed_w"].astype(jnp.float32)                    # [D, F-1]
    # cat_embed table with Linear bias folded in, transposed -> [D, V]
    tab = (params["cat_embed"].astype(jnp.float32)
           + params["embed_b"].astype(jnp.float32)[None, :]).T
    cent = params["centroids"].astype(jnp.float32)                # [C, D]
    c2 = jnp.sum(cent * cent, axis=-1, keepdims=True)             # [C, 1]
    inv_sqrt_d = 1.0 / float(np.sqrt(num_dim))
    # Fold embed2 @ centroids / sqrt(D) into a single [1, C] GEMV weight.
    w2c = (params["embed2_w"].astype(jnp.float32) @ cent.T) * inv_sqrt_d
    b2 = params["embed2_b"].astype(jnp.float32).reshape(1, 1)     # [1, 1]

    out = pl.pallas_call(
        _kmeans_kernel,
        out_shape=jax.ShapeDtypeStruct((1, n_pad), jnp.float32),
        grid=(n_tiles,),
        in_specs=[
            pl.BlockSpec((F - 1, row_tile), lambda i: (0, i)),    # x_cont.T
            pl.BlockSpec((1, row_tile), lambda i: (0, i)),        # cat indices
            pl.BlockSpec(w1.shape, lambda i: (0, 0)),             # resident
            pl.BlockSpec(tab.shape, lambda i: (0, 0)),
            pl.BlockSpec(cent.shape, lambda i: (0, 0)),
            pl.BlockSpec(c2.shape, lambda i: (0, 0)),
            pl.BlockSpec(w2c.shape, lambda i: (0, 0)),
            pl.BlockSpec(b2.shape, lambda i: (0, 0)),
        ],
        out_specs=pl.BlockSpec((1, row_tile), lambda i: (0, i)),  # lane-dense
        compiler_params=pltpu.CompilerParams(
            dimension_semantics=("parallel",)),
    )(xT, idx2d, w1, tab, cent, c2, w2c, b2)

    output2 = out.reshape(n_pad)[:n].reshape(B, S, 1)

    loss = jnp.float32(0.0)
    if y is not None:
        # MSE loss branch kept in plain JAX (trivial elementwise op).
        pl_len = pred_len if pred_len is not None else S
        loss = jnp.mean((y - output2[:, -pl_len:, :]) ** 2)
    return output2, loss


def _reference_forward(x, params, *, num_dim):
    """Pure-JAX reference mirroring the PyTorch forward, for verification."""
    x_cat = params["cat_embed"][x[:, :, -1].astype(jnp.int32)]
    h = x[:, :, :-1] @ params["embed_w"].T + params["embed_b"]
    h = h + x_cat
    diff = h[:, :, None, :] - params["centroids"][None, None, :, :]
    d = jnp.sqrt(jnp.sum(diff * diff, axis=-1))
    p = jax.nn.softmax(-d, axis=-1)
    out = jnp.einsum("bsc,cd->bsd", p, params["centroids"]) / np.sqrt(num_dim)
    return out @ params["embed2_w"].T + params["embed2_b"]


if __name__ == "__main__":
    # Module hyper-parameters (small, consistent with the forward pass).
    input_size = 5        # 4 continuous features + 1 categorical column
    num_dim = 32
    num_clusters = 8
    pred_len = 4
    n_uniques = 10
    B, S = 2, 8

    key = jax.random.PRNGKey(0)
    k_cont, k_cat, k_w1, k_b1, k_ce, k_c, k_w2, k_b2 = jax.random.split(key, 8)

    # Deterministic parameter init (shapes match the nn.Module __init__).
    params = {
        "embed_w": jax.random.normal(k_w1, (num_dim, input_size - 1), jnp.float32) * 0.1,
        "embed_b": jax.random.normal(k_b1, (num_dim,), jnp.float32) * 0.1,
        "cat_embed": jax.random.normal(k_ce, (n_uniques + 1, num_dim), jnp.float32),
        "centroids": jax.random.normal(k_c, (num_clusters, num_dim), jnp.float32),
        "embed2_w": jax.random.normal(k_w2, (1, num_dim), jnp.float32) * 0.1,
        "embed2_b": jax.random.normal(k_b2, (1,), jnp.float32) * 0.1,
    }

    # Input: continuous features + integer-valued categorical last column.
    x_cont = jax.random.normal(k_cont, (B, S, input_size - 1), jnp.float32)
    x_cat = jax.random.randint(k_cat, (B, S, 1), 0, n_uniques + 1).astype(jnp.float32)
    x = jnp.concatenate([x_cont, x_cat], axis=-1)      # [B, S, input_size]

    out2, loss = trainable_kmeans_forward(x, params, num_dim=num_dim,
                                          pred_len=pred_len)
    out2 = jax.block_until_ready(out2)

    ref = _reference_forward(x, params, num_dim=num_dim)
    # Tolerance loosened slightly vs. exact f32: the softmax denominator uses
    # the EUP approximate reciprocal and the cdist uses the expanded form.
    np.testing.assert_allclose(np.asarray(out2), np.asarray(ref),
                               rtol=2e-3, atol=2e-3)

    print("KERNEL_OK")
</pallas_src>

<mosaic_0001>
module attributes {stable_mosaic.version = 11 : i64} {
  func.func @_kmeans_kernel(%arg0: i32, %arg1: memref<4x128xf32, #tpu.memory_space<vmem>>, %arg2: memref<1x128xi32, #tpu.memory_space<vmem>>, %arg3: memref<32x4xf32, #tpu.memory_space<vmem>>, %arg4: memref<32x11xf32, #tpu.memory_space<vmem>>, %arg5: memref<8x32xf32, #tpu.memory_space<vmem>>, %arg6: memref<8x1xf32, #tpu.memory_space<vmem>>, %arg7: memref<1x8xf32, #tpu.memory_space<vmem>>, %arg8: memref<1x1xf32, #tpu.memory_space<vmem>>, %arg9: memref<1x128xf32, #tpu.memory_space<vmem>>) attributes {dimension_semantics = [#tpu.dimension_semantics<parallel>], iteration_bounds = array<i64: 1>, scalar_prefetch = 0 : i64, scratch_operands = 0 : i64, tpu.core_type = #tpu.core_type<tc>, window_params = [{transform_indices = @transform_0, window_bounds = array<i64: 4, 128>}, {transform_indices = @transform_1, window_bounds = array<i64: 1, 128>}, {pipeline_mode = #tpu.pipeline_mode<synchronous>, transform_indices = @transform_2, window_bounds = array<i64: 32, 4>}, {pipeline_mode = #tpu.pipeline_mode<synchronous>, transform_indices = @transform_3, window_bounds = array<i64: 32, 11>}, {pipeline_mode = #tpu.pipeline_mode<synchronous>, transform_indices = @transform_4, window_bounds = array<i64: 8, 32>}, {pipeline_mode = #tpu.pipeline_mode<synchronous>, transform_indices = @transform_5, window_bounds = array<i64: 8, 1>}, {pipeline_mode = #tpu.pipeline_mode<synchronous>, transform_indices = @transform_6, window_bounds = array<i64: 1, 8>}, {pipeline_mode = #tpu.pipeline_mode<synchronous>, transform_indices = @transform_7, window_bounds = array<i64: 1, 1>}, {transform_indices = @transform_8, window_bounds = array<i64: 1, 128>}]} {
    %c0 = arith.constant 0 : index
    %c0_0 = arith.constant 0 : index
    %0 = vector.load %arg3[%c0, %c0_0] : memref<32x4xf32, #tpu.memory_space<vmem>>, vector<32x4xf32>
    %c0_1 = arith.constant 0 : index
    %c0_2 = arith.constant 0 : index
    %1 = vector.load %arg1[%c0_1, %c0_2] : memref<4x128xf32, #tpu.memory_space<vmem>>, vector<4x128xf32>
    %cst = arith.constant dense<0.000000e+00> : vector<32x128xf32>
    %2 = tpu.matmul %0, %1, %cst {dimension_numbers = #tpu.dot_dimension_numbers<[1], [0], [0], [1], [0, 0, 1, 1], [], []>} : vector<32x4xf32>, vector<4x128xf32>, vector<32x128xf32> -> vector<32x128xf32>
    %c0_3 = arith.constant 0 : index
    %c0_4 = arith.constant 0 : index
    %3 = vector.load %arg2[%c0_3, %c0_4] : memref<1x128xi32, #tpu.memory_space<vmem>>, vector<1x128xi32>
    %4 = tpu.iota {dimensions = array<i32: 0>} : vector<11x128xi32>
    %5 = vector.broadcast %3 : vector<1x128xi32> to vector<11x128xi32>
    %6 = arith.cmpi eq, %4, %5 : vector<11x128xi32>
    %7 = arith.extui %6 : vector<11x128xi1> to vector<11x128xi32>
    %8 = arith.sitofp %7 : vector<11x128xi32> to vector<11x128xf32>
    %c0_5 = arith.constant 0 : index
    %c0_6 = arith.constant 0 : index
    %9 = vector.load %arg4[%c0_5, %c0_6] : memref<32x11xf32, #tpu.memory_space<vmem>>, vector<32x11xf32>
    %cst_7 = arith.constant dense<0.000000e+00> : vector<32x128xf32>
    %10 = tpu.matmul %9, %8, %cst_7 {dimension_numbers = #tpu.dot_dimension_numbers<[1], [0], [0], [1], [0, 0, 1, 1], [], []>} : vector<32x11xf32>, vector<11x128xf32>, vector<32x128xf32> -> vector<32x128xf32>
    %11 = arith.addf %2, %10 : vector<32x128xf32>
    %12 = arith.mulf %11, %11 : vector<32x128xf32>
    %cst_8 = arith.constant dense<0.000000e+00> : vector<128xf32>
    %13 = vector.multi_reduction <add>, %12, %cst_8 [0] : vector<32x128xf32> to vector<128xf32>
    %14 = vector.shape_cast %13 : vector<128xf32> to vector<1x128xf32>
    %c0_9 = arith.constant 0 : index
    %c0_10 = arith.constant 0 : index
    %15 = vector.load %arg5[%c0_9, %c0_10] : memref<8x32xf32, #tpu.memory_space<vmem>>, vector<8x32xf32>
    %cst_11 = arith.constant dense<0.000000e+00> : vector<8x128xf32>
    %16 = tpu.matmul %15, %11, %cst_11 {dimension_numbers = #tpu.dot_dimension_numbers<[1], [0], [0], [1], [0, 0, 1, 1], [], []>} : vector<8x32xf32>, vector<32x128xf32>, vector<8x128xf32> -> vector<8x128xf32>
    %c0_12 = arith.constant 0 : index
    %c0_13 = arith.constant 0 : index
    %17 = vector.load %arg6[%c0_12, %c0_13] : memref<8x1xf32, #tpu.memory_space<vmem>>, vector<8x1xf32>
    %18 = vector.broadcast %14 : vector<1x128xf32> to vector<8x128xf32>
    %19 = vector.broadcast %17 : vector<8x1xf32> to vector<8x128xf32>
    %20 = arith.addf %18, %19 : vector<8x128xf32>
    %cst_14 = arith.constant 2.000000e+00 : f32
    %21 = vector.broadcast %cst_14 : f32 to vector<8x128xf32>
    %22 = arith.mulf %21, %16 : vector<8x128xf32>
    %23 = arith.subf %20, %22 : vector<8x128xf32>
    %cst_15 = arith.constant 0.000000e+00 : f32
    %24 = vector.broadcast %cst_15 : f32 to vector<8x128xf32>
    %25 = arith.maximumf %23, %24 : vector<8x128xf32>
    %26 = math.sqrt %25 : vector<8x128xf32>
    %cst_16 = arith.constant 0.000000e+00 : f32
    %27 = vector.broadcast %cst_16 : f32 to vector<8x128xf32>
    %28 = arith.subf %27, %26 : vector<8x128xf32>
    %cst_17 = arith.constant dense<0xFF800000> : vector<128xf32>
    %29 = vector.multi_reduction <maximumf>, %28, %cst_17 [0] : vector<8x128xf32> to vector<128xf32>
    %30 = vector.shape_cast %29 : vector<128xf32> to vector<1x128xf32>
    %31 = vector.broadcast %30 : vector<1x128xf32> to vector<8x128xf32>
    %32 = arith.subf %28, %31 : vector<8x128xf32>
    %33 = math.exp %32 : vector<8x128xf32>
    %cst_18 = arith.constant dense<0.000000e+00> : vector<128xf32>
    %34 = vector.multi_reduction <add>, %33, %cst_18 [0] : vector<8x128xf32> to vector<128xf32>
    %35 = vector.shape_cast %34 : vector<128xf32> to vector<1x128xf32>
    %c0_19 = arith.constant 0 : index
    %c0_20 = arith.constant 0 : index
    %36 = vector.load %arg7[%c0_19, %c0_20] : memref<1x8xf32, #tpu.memory_space<vmem>>, vector<1x8xf32>
    %cst_21 = arith.constant dense<0.000000e+00> : vector<1x128xf32>
    %37 = tpu.matmul %36, %33, %cst_21 {dimension_numbers = #tpu.dot_dimension_numbers<[1], [0], [0], [1], [0, 0, 1, 1], [], []>} : vector<1x8xf32>, vector<8x128xf32>, vector<1x128xf32> -> vector<1x128xf32>
    %38 = tpu.reciprocal %35 {approx = true} : vector<1x128xf32> -> vector<1x128xf32>
    %39 = arith.mulf %37, %38 : vector<1x128xf32>
    %c0_22 = arith.constant 0 : index
    %c0_23 = arith.constant 0 : index
    %40 = vector.load %arg8[%c0_22, %c0_23] : memref<1x1xf32, #tpu.memory_space<vmem>>, vector<1x1xf32>
    %41 = vector.broadcast %40 : vector<1x1xf32> to vector<1x128xf32>
    %42 = arith.addf %39, %41 : vector<1x128xf32>
    %c0_24 = arith.constant 0 : index
    %c0_25 = arith.constant 0 : index
    %43 = vector.load %arg9[%c0_24, %c0_25] : memref<1x128xf32, #tpu.memory_space<vmem>>, vector<1x128xf32>
    tpu.vector_store %arg9[%c0_24, %c0_25], %42 {strides = array<i32>} : memref<1x128xf32, #tpu.memory_space<vmem>>, vector<1x128xf32>,
    return
  }
  func.func @transform_0(%arg0: i32) -> (i32, i32) {
    %c0_i32 = arith.constant 0 : i32
    %c0_i32_0 = arith.constant 0 : i32
    return %c0_i32, %arg0 : i32, i32
  }
  func.func @transform_1(%arg0: i32) -> (i32, i32) {
    %c0_i32 = arith.constant 0 : i32
    %c0_i32_0 = arith.constant 0 : i32
    return %c0_i32, %arg0 : i32, i32
  }
  func.func @transform_2(%arg0: i32) -> (i32, i32) {
    %c0_i32 = arith.constant 0 : i32
    %c0_i32_0 = arith.constant 0 : i32
    %c0_i32_1 = arith.constant 0 : i32
    return %c0_i32, %c0_i32_0 : i32, i32
  }
  func.func @transform_3(%arg0: i32) -> (i32, i32) {
    %c0_i32 = arith.constant 0 : i32
    %c0_i32_0 = arith.constant 0 : i32
    %c0_i32_1 = arith.constant 0 : i32
    return %c0_i32, %c0_i32_0 : i32, i32
  }
  func.func @transform_4(%arg0: i32) -> (i32, i32) {
    %c0_i32 = arith.constant 0 : i32
    %c0_i32_0 = arith.constant 0 : i32
    %c0_i32_1 = arith.constant 0 : i32
    return %c0_i32, %c0_i32_0 : i32, i32
  }
  func.func @transform_5(%arg0: i32) -> (i32, i32) {
    %c0_i32 = arith.constant 0 : i32
    %c0_i32_0 = arith.constant 0 : i32
    %c0_i32_1 = arith.constant 0 : i32
    return %c0_i32, %c0_i32_0 : i32, i32
  }
  func.func @transform_6(%arg0: i32) -> (i32, i32) {
    %c0_i32 = arith.constant 0 : i32
    %c0_i32_0 = arith.constant 0 : i32
    %c0_i32_1 = arith.constant 0 : i32
    return %c0_i32, %c0_i32_0 : i32, i32
  }
  func.func @transform_7(%arg0: i32) -> (i32, i32) {
    %c0_i32 = arith.constant 0 : i32
    %c0_i32_0 = arith.constant 0 : i32
    %c0_i32_1 = arith.constant 0 : i32
    return %c0_i32, %c0_i32_0 : i32, i32
  }
  func.func @transform_8(%arg0: i32) -> (i32, i32) {
    %c0_i32 = arith.constant 0 : i32
    %c0_i32_0 = arith.constant 0 : i32
    return %c0_i32, %arg0 : i32, i32
  }
}

</mosaic_0001>

<llo_original>
// kernel: trainable_kmeans_forward.1
$region0: #{trainable_kmeans_forward.1}
  #allocation0 [shape = 'u32[]', space=smem, size = 0x4, offset = 0x4, fixed_abs, tag = 'smem constant byte address 0x4 - core index']
  #allocation1 [shape = 'u32[144,128]{1,0:T(1,128)}', space=vmem, size = 0x12000, scoped, tag = 'internal scratch']
  #allocation2 [shape = 'f32[1,1]{1,0:T(1,128)S(1)}', space=vmem, size = 0x200, scoped, tag = 'scoped memory for trainable_kmeans_forward.1']
  %s0 = inlined_call_operand.vmem [shape: f32[4,128], index: 0, kind: input, shape index: {}]
  %s1 = inlined_call_operand.vmem [shape: s32[1,128], index: 1, kind: input, shape index: {}]
  %s2 = inlined_call_operand.vmem [shape: f32[32,4], index: 2, kind: input, shape index: {}]
  %s3 = inlined_call_operand.vmem [shape: f32[32,11], index: 3, kind: input, shape index: {}]
  %s4 = inlined_call_operand.vmem [shape: f32[8,32], index: 4, kind: input, shape index: {}]
  %s5 = inlined_call_operand.vmem [shape: f32[8,1], index: 5, kind: input, shape index: {}]
  %s6 = inlined_call_operand.vmem [shape: f32[1,8], index: 6, kind: input, shape index: {}]
  %s7 = inlined_call_operand.<no memory space> [shape: f32[1,1], index: 7, kind: input, shape index: {}]
  %s8 = inlined_call_operand.vmem [shape: f32[1,128], index: 8, kind: output, shape index: {}]
  %s9 = sld [smem:[#allocation0]]
  $region42: #{trainable_kmeans_forward.1} parent=0
    _
  %s11 = ssub.s32 1, %s9
  %s12 = scalar_select 0, %s11, %s9
  %v13 = vstv %s7
  %14 = vst [vmem:[#allocation2] sm:$0x1] %v13
  // Predicated region
  $region2: #{trainable_kmeans_forward.1} parent=0 // pred_check
    _
  $region3: #{trainable_kmeans_forward.1} parent=0 // pred_check_branch
    %16 = sbr.rel (0) target = $region5
  $region4: #{trainable_kmeans_forward.1} parent=0 // pred_region
    _
  $region5: #{trainable_kmeans_forward.1} parent=0 // pred_fallthru
    _
  // Predicated region
  $region6: #{trainable_kmeans_forward.1} parent=0 // pred_check
    _
  $region7: #{trainable_kmeans_forward.1} parent=0 // pred_check_branch
    %18 = sbr.rel (0) target = $region9
  $region8: #{trainable_kmeans_forward.1} parent=0 // pred_region
    _
  $region9: #{trainable_kmeans_forward.1} parent=0 // pred_fallthru
    _
  // Predicated region
  $region10: #{trainable_kmeans_forward.1} parent=0 // pred_check
    _
  $region11: #{trainable_kmeans_forward.1} parent=0 // pred_check_branch
    %20 = sbr.rel (0) target = $region13
  $region12: #{trainable_kmeans_forward.1} parent=0 // pred_region
    _
  $region13: #{trainable_kmeans_forward.1} parent=0 // pred_fallthru
    _
  // Predicated region
  $region14: #{trainable_kmeans_forward.1} parent=0 // pred_check
    _
  $region15: #{trainable_kmeans_forward.1} parent=0 // pred_check_branch
    %22 = sbr.rel (0) target = $region17
  $region16: #{trainable_kmeans_forward.1} parent=0 // pred_region
    _
  $region17: #{trainable_kmeans_forward.1} parent=0 // pred_fallthru
    _
  // Predicated region
  $region18: #{trainable_kmeans_forward.1} parent=0 // pred_check
    _
  $region19: #{trainable_kmeans_forward.1} parent=0 // pred_check_branch
    %24 = sbr.rel (0) target = $region21
  $region20: #{trainable_kmeans_forward.1} parent=0 // pred_region
    _
  $region21: #{trainable_kmeans_forward.1} parent=0 // pred_fallthru
    _
  // Predicated region
  $region22: #{trainable_kmeans_forward.1} parent=0 // pred_check
    _
  $region23: #{trainable_kmeans_forward.1} parent=0 // pred_check_branch
    %26 = sbr.rel (0) target = $region25
  $region24: #{trainable_kmeans_forward.1} parent=0 // pred_region
    _
  $region25: #{trainable_kmeans_forward.1} parent=0 // pred_fallthru
    _
  // Predicated region
  $region26: #{trainable_kmeans_forward.1} parent=0 // pred_check
    _
  $region27: #{trainable_kmeans_forward.1} parent=0 // pred_check_branch
    %28 = sbr.rel (0) target = $region29
  $region28: #{trainable_kmeans_forward.1} parent=0 // pred_region
    _
  $region29: #{trainable_kmeans_forward.1} parent=0 // pred_fallthru
    _
  // Predicated region
  $region30: #{trainable_kmeans_forward.1} parent=0 // pred_check
    _
  $region31: #{trainable_kmeans_forward.1} parent=0 // pred_check_branch
    %30 = sbr.rel (0) target = $region33
  $region32: #{trainable_kmeans_forward.1} parent=0 // pred_region
    _
  $region33: #{trainable_kmeans_forward.1} parent=0 // pred_fallthru
    _
  %v31 = vld [vmem:[%s2] sm:$0xff]
  %v32 = vld [vmem:[%s2 + $0x8] sm:$0xff]
  %v33 = vld [vmem:[%s2 + $0x10] sm:$0xff]
  %v34 = vld [vmem:[%s2 + $0x18] sm:$0xff]
  %v35 = vld [vmem:[%s0] sm:$0xf]
  %v36 = vld [vmem:[%s1] sm:$0x1]
  %v37 = vlaneseq
  %v38 = vshrl.u32 %v37, 7
  %v39 = vadd.s32 %v38, 8
  %v40 = vlaneseq
  %v41 = vshrl.u32 %v40, 7
  %v42 = vsub.s32 0, %v41
  %v43 = vrot.slane %v36, %v42
  %vm44 = vcmp.eq.s32.totalorder %v38, %v43
  %vm45 = vcmp.eq.s32.totalorder %v39, %v43
  %v46 = vsel %vm44, 1, 0
  %v47 = vsel %vm45, 1, 0
  %v48 = vcvt.s32.f32 %v46
  %v49 = vcvt.s32.f32 %v47
  %v50 = vld [vmem:[%s3] sm:$0xff]
  %v51 = vld [vmem:[%s3 + $0x8] sm:$0xff]
  %v52 = vld [vmem:[%s3 + $0x10] sm:$0xff]
  %v53 = vld [vmem:[%s3 + $0x18] sm:$0xff]
  %vm54 = vcmask 89088
  %v56 = vsel %vm54, %v50, 0
  %v59 = vsel %vm54, %v51, 0
  %v62 = vsel %vm54, %v52, 0
  %v65 = vsel %vm54, %v53, 0
  %vm67 = vcmask 1042432
  %v69 = vsel %vm67, %v49, 0
  %71 = vmatprep.subr.mxu0 0.0
  %72 = vmatpush1.msra.mxu0 %v48
  %73 = vmatprep.subr.mxu0 0.0
  %74 = vmatpush1.msra.mxu0 %v69
  %75 = vmatprep.subr.mxu0 0.0
  %76 = vmatpush1.msra.mxu0 0.0
  %77 = vmatprep.subr.mxu0 0.0
  %78 = vmatpush1.msra.mxu0 0.0
  %79 = vmatprep.subr.mxu0 0.0
  %80 = vmatpush1.msra.mxu0 0.0
  %81 = vmatprep.subr.mxu0 0.0
  %82 = vmatpush1.msra.mxu0 0.0
  %83 = vmatprep.subr.mxu0 0.0
  %84 = vmatpush1.msra.mxu0 0.0
  %85 = vmatprep.subr.mxu0 0.0
  %86 = vmatpush1.msra.mxu0 0.0
  %87 = vmatprep.subr.mxu0 0.0
  %88 = vmatpush1.msra.mxu0 0.0
  %89 = vmatprep.subr.mxu0 0.0
  %90 = vmatpush1.msra.mxu0 0.0
  %91 = vmatprep.subr.mxu0 0.0
  %92 = vmatpush1.msra.mxu0 0.0
  %93 = vmatprep.subr.mxu0 0.0
  %94 = vmatpush1.msra.mxu0 0.0
  %95 = vmatprep.subr.mxu0 0.0
  %96 = vmatpush1.msra.mxu0 0.0
  %97 = vmatprep.subr.mxu0 0.0
  %98 = vmatpush1.msra.mxu0 0.0
  %99 = vmatprep.subr.mxu0 0.0
  %100 = vmatpush1.msra.mxu0 0.0
  %101 = vmatprep.subr.mxu0 0.0
  %102 = vmatpush1.msra.mxu0 0.0
  %103 = vmatprep.subr.mxu0 0.0
  %104 = vmatpush1.msra.mxu0 0.0
  %105 = vmatprep.subr.mxu0 0.0
  %106 = vmatpush1.msra.mxu0 0.0
  %107 = vmatprep.subr.mxu0 0.0
  %108 = vmatpush1.msra.mxu0 0.0
  %109 = vmatprep.subr.mxu0 0.0
  %110 = vmatpush1.msra.mxu0 0.0
  %111 = vmatprep.subr.mxu0 0.0
  %112 = vmatpush1.msra.mxu0 0.0
  %113 = vmatprep.subr.mxu0 0.0
  %114 = vmatpush1.msra.mxu0 0.0
  %115 = vmatprep.subr.mxu0 0.0
  %116 = vmatpush1.msra.mxu0 0.0
  %117 = vmatprep.subr.mxu0 0.0
  %118 = vmatpush1.msra.mxu0 0.0
  %119 = vmatprep.subr.mxu0 0.0
  %120 = vmatpush1.msra.mxu0 0.0
  %121 = vmatprep.subr.mxu0 0.0
  %122 = vmatpush1.msra.mxu0 0.0
  %123 = vmatprep.subr.mxu0 0.0
  %124 = vmatpush1.msra.mxu0 0.0
  %125 = vmatprep.subr.mxu0 0.0
  %126 = vmatpush1.msra.mxu0 0.0
  %127 = vmatprep.subr.mxu0 0.0
  %128 = vmatpush1.msra.mxu0 0.0
  %129 = vmatprep.subr.mxu0 0.0
  %130 = vmatpush1.msra.mxu0 0.0
  %131 = vmatprep.subr.mxu0 0.0
  %132 = vmatpush1.msra.mxu0 0.0
  %133 = vmatprep.subr.mxu0 0.0
  %134 = vmatpush1.msra.mxu0 0.0
  %135 = vmatprep.mubr.f32.mxu0 0.0
  %136 = vmatmul.mubr.f32.gmra.mrb[0].mxu0 %v56
  %v137 = vpop.f32.mrb[0].mxu0
  %v138 = vadd.f32 0.0, %v137
  %v139 = vpop.f32.mrb[0].mxu0
  %140 = vmatprep.mubr.f32.mxu0 0.0
  %141 = vmatmul.mubr.f32.gmra.mrb[0].mxu0 %v59
  %v142 = vpop.f32.mrb[0].mxu0
  %v143 = vadd.f32 0.0, %v142
  %v144 = vpop.f32.mrb[0].mxu0
  %145 = vmatprep.mubr.f32.mxu0 0.0
  %146 = vmatmul.mubr.f32.gmra.mrb[0].mxu0 %v62
  %v147 = vpop.f32.mrb[0].mxu0
  %v148 = vadd.f32 0.0, %v147
  %v149 = vpop.f32.mrb[0].mxu0
  %150 = vmatprep.mubr.f32.mxu0 0.0
  %151 = vmatmul.mubr.f32.gmra.mrb[0].mxu0 %v65
  %v152 = vpop.f32.mrb[0].mxu0
  %v153 = vadd.f32 0.0, %v152
  %v154 = vpop.f32.mrb[0].mxu0
  %155 = vdwg.mxu0
  %vm156 = vcmask 31744
  %v158 = vsel %vm156, %v31, 0
  %v161 = vsel %vm156, %v32, 0
  %v164 = vsel %vm156, %v33, 0
  %v167 = vsel %vm156, %v34, 0
  %vm169 = vcmask 1043456
  %v171 = vsel %vm169, %v35, 0
  %173 = vmatprep.subr.mxu0 0.0
  %174 = vmatpush1.msra.mxu0 %v171
  %175 = vmatprep.subr.mxu0 0.0
  %176 = vmatpush1.msra.mxu0 0.0
  %177 = vmatprep.subr.mxu0 0.0
  %178 = vmatpush1.msra.mxu0 0.0
  %179 = vmatprep.subr.mxu0 0.0
  %180 = vmatpush1.msra.mxu0 0.0
  %181 = vmatprep.subr.mxu0 0.0
  %182 = vmatpush1.msra.mxu0 0.0
  %183 = vmatprep.subr.mxu0 0.0
  %184 = vmatpush1.msra.mxu0 0.0
  %185 = vmatprep.subr.mxu0 0.0
  %186 = vmatpush1.msra.mxu0 0.0
  %187 = vmatprep.subr.mxu0 0.0
  %188 = vmatpush1.msra.mxu0 0.0
  %189 = vmatprep.subr.mxu0 0.0
  %190 = vmatpush1.msra.mxu0 0.0
  %191 = vmatprep.subr.mxu0 0.0
  %192 = vmatpush1.msra.mxu0 0.0
  %193 = vmatprep.subr.mxu0 0.0
  %194 = vmatpush1.msra.mxu0 0.0
  %195 = vmatprep.subr.mxu0 0.0
  %196 = vmatpush1.msra.mxu0 0.0
  %197 = vmatprep.subr.mxu0 0.0
  %198 = vmatpush1.msra.mxu0 0.0
  %199 = vmatprep.subr.mxu0 0.0
  %200 = vmatpush1.msra.mxu0 0.0
  %201 = vmatprep.subr.mxu0 0.0
  %202 = vmatpush1.msra.mxu0 0.0
  %203 = vmatprep.subr.mxu0 0.0
  %204 = vmatpush1.msra.mxu0 0.0
  %205 = vmatprep.subr.mxu0 0.0
  %206 = vmatpush1.msra.mxu0 0.0
  %207 = vmatprep.subr.mxu0 0.0
  %208 = vmatpush1.msra.mxu0 0.0
  %209 = vmatprep.subr.mxu0 0.0
  %210 = vmatpush1.msra.mxu0 0.0
  %211 = vmatprep.subr.mxu0 0.0
  %212 = vmatpush1.msra.mxu0 0.0
  %213 = vmatprep.subr.mxu0 0.0
  %214 = vmatpush1.msra.mxu0 0.0
  %215 = vmatprep.subr.mxu0 0.0
  %216 = vmatpush1.msra.mxu0 0.0
  %217 = vmatprep.subr.mxu0 0.0
  %218 = vmatpush1.msra.mxu0 0.0
  %219 = vmatprep.subr.mxu0 0.0
  %220 = vmatpush1.msra.mxu0 0.0
  %221 = vmatprep.subr.mxu0 0.0
  %222 = vmatpush1.msra.mxu0 0.0
  %223 = vmatprep.subr.mxu0 0.0
  %224 = vmatpush1.msra.mxu0 0.0
  %225 = vmatprep.subr.mxu0 0.0
  %226 = vmatpush1.msra.mxu0 0.0
  %227 = vmatprep.subr.mxu0 0.0
  %228 = vmatpush1.msra.mxu0 0.0
  %229 = vmatprep.subr.mxu0 0.0
  %230 = vmatpush1.msra.mxu0 0.0
  %231 = vmatprep.subr.mxu0 0.0
  %232 = vmatpush1.msra.mxu0 0.0
  %233 = vmatprep.subr.mxu0 0.0
  %234 = vmatpush1.msra.mxu0 0.0
  %235 = vmatprep.subr.mxu0 0.0
  %236 = vmatpush1.msra.mxu0 0.0
  %237 = vmatprep.mubr.f32.mxu0 0.0
  %238 = vmatmul.mubr.f32.gmra.mrb[0].mxu0 %v158
  %v239 = vpop.f32.mrb[0].mxu0
  %v240 = vadd.f32 %v138, %v239
  %v241 = vpop.f32.mrb[0].mxu0
  %242 = vmatprep.mubr.f32.mxu0 0.0
  %243 = vmatmul.mubr.f32.gmra.mrb[0].mxu0 %v161
  %v244 = vpop.f32.mrb[0].mxu0
  %v245 = vadd.f32 %v143, %v244
  %v246 = vpop.f32.mrb[0].mxu0
  %247 = vmatprep.mubr.f32.mxu0 0.0
  %248 = vmatmul.mubr.f32.gmra.mrb[0].mxu0 %v164
  %v249 = vpop.f32.mrb[0].mxu0
  %v250 = vadd.f32 %v148, %v249
  %v251 = vpop.f32.mrb[0].mxu0
  %252 = vmatprep.mubr.f32.mxu0 0.0
  %253 = vmatmul.mubr.f32.gmra.mrb[0].mxu0 %v167
  %v254 = vpop.f32.mrb[0].mxu0
  %v255 = vadd.f32 %v153, %v254
  %v256 = vpop.f32.mrb[0].mxu0
  %257 = vdwg.mxu0
  %v258 = vmul.f32 %v240, %v240
  %v259 = vmul.f32 %v245, %v245
  %v260 = vmul.f32 %v250, %v250
  %v261 = vmul.f32 %v255, %v255
  %v262 = vadd.f32 %v258, %v259
  %v263 = vadd.f32 %v262, %v260
  %v264 = vadd.f32 %v263, %v261
  %v265 = vrot.slane %v264, 4
  %v266 = vadd.f32 %v264, %v265
  %v267 = vrot.slane %v266, 2
  %v268 = vadd.f32 %v266, %v267
  %v269 = vrot.slane %v268, 1
  %v270 = vadd.f32 %v268, %v269
  %v271 = vld [vmem:[%s4] sm:$0xff]
  %vm272 = vcmask 261120
  %v274 = vsel %vm272, %v271, 0
  %276 = vmatprep.subr.mxu0 0.0
  %277 = vmatpush1.msra.mxu0 %v240
  %278 = vmatprep.subr.mxu0 0.0
  %279 = vmatpush1.msra.mxu0 %v245
  %280 = vmatprep.subr.mxu0 0.0
  %281 = vmatpush1.msra.mxu0 %v250
  %282 = vmatprep.subr.mxu0 0.0
  %283 = vmatpush1.msra.mxu0 %v255
  %284 = vmatprep.subr.mxu0 0.0
  %285 = vmatpush1.msra.mxu0 0.0
  %286 = vmatprep.subr.mxu0 0.0
  %287 = vmatpush1.msra.mxu0 0.0
  %288 = vmatprep.subr.mxu0 0.0
  %289 = vmatpush1.msra.mxu0 0.0
  %290 = vmatprep.subr.mxu0 0.0
  %291 = vmatpush1.msra.mxu0 0.0
  %292 = vmatprep.subr.mxu0 0.0
  %293 = vmatpush1.msra.mxu0 0.0
  %294 = vmatprep.subr.mxu0 0.0
  %295 = vmatpush1.msra.mxu0 0.0
  %296 = vmatprep.subr.mxu0 0.0
  %297 = vmatpush1.msra.mxu0 0.0
  %298 = vmatprep.subr.mxu0 0.0
  %299 = vmatpush1.msra.mxu0 0.0
  %300 = vmatprep.subr.mxu0 0.0
  %301 = vmatpush1.msra.mxu0 0.0
  %302 = vmatprep.subr.mxu0 0.0
  %303 = vmatpush1.msra.mxu0 0.0
  %304 = vmatprep.subr.mxu0 0.0
  %305 = vmatpush1.msra.mxu0 0.0
  %306 = vmatprep.subr.mxu0 0.0
  %307 = vmatpush1.msra.mxu0 0.0
  %308 = vmatprep.subr.mxu0 0.0
  %309 = vmatpush1.msra.mxu0 0.0
  %310 = vmatprep.subr.mxu0 0.0
  %311 = vmatpush1.msra.mxu0 0.0
  %312 = vmatprep.subr.mxu0 0.0
  %313 = vmatpush1.msra.mxu0 0.0
  %314 = vmatprep.subr.mxu0 0.0
  %315 = vmatpush1.msra.mxu0 0.0
  %316 = vmatprep.subr.mxu0 0.0
  %317 = vmatpush1.msra.mxu0 0.0
  %318 = vmatprep.subr.mxu0 0.0
  %319 = vmatpush1.msra.mxu0 0.0
  %320 = vmatprep.subr.mxu0 0.0
  %321 = vmatpush1.msra.mxu0 0.0
  %322 = vmatprep.subr.mxu0 0.0
  %323 = vmatpush1.msra.mxu0 0.0
  %324 = vmatprep.subr.mxu0 0.0
  %325 = vmatpush1.msra.mxu0 0.0
  %326 = vmatprep.subr.mxu0 0.0
  %327 = vmatpush1.msra.mxu0 0.0
  %328 = vmatprep.subr.mxu0 0.0
  %329 = vmatpush1.msra.mxu0 0.0
  %330 = vmatprep.subr.mxu0 0.0
  %331 = vmatpush1.msra.mxu0 0.0
  %332 = vmatprep.subr.mxu0 0.0
  %333 = vmatpush1.msra.mxu0 0.0
  %334 = vmatprep.subr.mxu0 0.0
  %335 = vmatpush1.msra.mxu0 0.0
  %336 = vmatprep.subr.mxu0 0.0
  %337 = vmatpush1.msra.mxu0 0.0
  %338 = vmatprep.subr.mxu0 0.0
  %339 = vmatpush1.msra.mxu0 0.0
  %340 = vmatprep.mubr.f32.mxu0 0.0
  %341 = vmatmul.mubr.f32.gmra.mrb[0].mxu0 %v274
  %v342 = vpop.f32.mrb[0].mxu0
  %v343 = vadd.f32 0.0, %v342
  %v344 = vpop.f32.mrb[0].mxu0
  %345 = vdwg.mxu0
  %v346 = vld [vmem:[%s5] sm:$0xff]
  %348 = vset.pattern.permute.xlu0 0
  %349 = vperm.xlu0 %348, %v346
  %v350 = vpop.permute.xlu0 %349
  %v352 = vadd.f32 %v270, %v350
  %v353 = vmul.f32 %v343, 2.0
  %v354 = vsub.f32 %v352, %v353
  %v355 = vmax.f32 %v354, 0.0
  %v356 = vrsqrt.pop %v355
  %v357 = vmul.f32 %v355, %v356
  %vm358 = vcmp.eq.f32.partialorder %v355, inf
  %v359 = vsel %vm358, %v355, %v357
  %vm360 = vcmp.eq.f32.partialorder %v355, 0.0
  %v361 = vand.u32 %v355, 2147483648
  %v362 = vsel %vm360, %v361, %v359
  %v363 = vsub.f32 0.0, %v362
  %v364 = vrot.slane %v363, 4
  %v365 = vmax.f32 %v363, %v364
  %v366 = vrot.slane %v365, 2
  %v367 = vmax.f32 %v365, %v366
  %v368 = vrot.slane %v367, 1
  %v369 = vmax.f32 %v367, %v368
  %v370 = vsub.f32 %v363, %v369
  %v371 = vmul.f32 %v370, 1.442695
  %v372 = vpow.pop %v371
  %v373 = vrot.slane %v372, 4
  %v374 = vadd.f32 %v372, %v373
  %v375 = vrot.slane %v374, 2
  %v376 = vadd.f32 %v374, %v375
  %v377 = vrot.slane %v376, 1
  %v378 = vadd.f32 %v376, %v377
  %v379 = vld [vmem:[%s6] sm:$0x1]
  %vm380 = vcmask 64512
  %v382 = vsel %vm380, %v379, 0
  %384 = vmatprep.subr.mxu0 0.0
  %385 = vmatpush1.msra.mxu0 %v372
  %386 = vmatprep.subr.mxu0 0.0
  %387 = vmatpush1.msra.mxu0 0.0
  %388 = vmatprep.subr.mxu0 0.0
  %389 = vmatpush1.msra.mxu0 0.0
  %390 = vmatprep.subr.mxu0 0.0
  %391 = vmatpush1.msra.mxu0 0.0
  %392 = vmatprep.subr.mxu0 0.0
  %393 = vmatpush1.msra.mxu0 0.0
  %394 = vmatprep.subr.mxu0 0.0
  %395 = vmatpush1.msra.mxu0 0.0
  %396 = vmatprep.subr.mxu0 0.0
  %397 = vmatpush1.msra.mxu0 0.0
  %398 = vmatprep.subr.mxu0 0.0
  %399 = vmatpush1.msra.mxu0 0.0
  %400 = vmatprep.subr.mxu0 0.0
  %401 = vmatpush1.msra.mxu0 0.0
  %402 = vmatprep.subr.mxu0 0.0
  %403 = vmatpush1.msra.mxu0 0.0
  %404 = vmatprep.subr.mxu0 0.0
  %405 = vmatpush1.msra.mxu0 0.0
  %406 = vmatprep.subr.mxu0 0.0
  %407 = vmatpush1.msra.mxu0 0.0
  %408 = vmatprep.subr.mxu0 0.0
  %409 = vmatpush1.msra.mxu0 0.0
  %410 = vmatprep.subr.mxu0 0.0
  %411 = vmatpush1.msra.mxu0 0.0
  %412 = vmatprep.subr.mxu0 0.0
  %413 = vmatpush1.msra.mxu0 0.0
  %414 = vmatprep.subr.mxu0 0.0
  %415 = vmatpush1.msra.mxu0 0.0
  %416 = vmatprep.subr.mxu0 0.0
  %417 = vmatpush1.msra.mxu0 0.0
  %418 = vmatprep.subr.mxu0 0.0
  %419 = vmatpush1.msra.mxu0 0.0
  %420 = vmatprep.subr.mxu0 0.0
  %421 = vmatpush1.msra.mxu0 0.0
  %422 = vmatprep.subr.mxu0 0.0
  %423 = vmatpush1.msra.mxu0 0.0
  %424 = vmatprep.subr.mxu0 0.0
  %425 = vmatpush1.msra.mxu0 0.0
  %426 = vmatprep.subr.mxu0 0.0
  %427 = vmatpush1.msra.mxu0 0.0
  %428 = vmatprep.subr.mxu0 0.0
  %429 = vmatpush1.msra.mxu0 0.0
  %430 = vmatprep.subr.mxu0 0.0
  %431 = vmatpush1.msra.mxu0 0.0
  %432 = vmatprep.subr.mxu0 0.0
  %433 = vmatpush1.msra.mxu0 0.0
  %434 = vmatprep.subr.mxu0 0.0
  %435 = vmatpush1.msra.mxu0 0.0
  %436 = vmatprep.subr.mxu0 0.0
  %437 = vmatpush1.msra.mxu0 0.0
  %438 = vmatprep.subr.mxu0 0.0
  %439 = vmatpush1.msra.mxu0 0.0
  %440 = vmatprep.subr.mxu0 0.0
  %441 = vmatpush1.msra.mxu0 0.0
  %442 = vmatprep.subr.mxu0 0.0
  %443 = vmatpush1.msra.mxu0 0.0
  %444 = vmatprep.subr.mxu0 0.0
  %445 = vmatpush1.msra.mxu0 0.0
  %446 = vmatprep.subr.mxu0 0.0
  %447 = vmatpush1.msra.mxu0 0.0
  %448 = vmatprep.mubr.f32.mxu0 0.0
  %449 = vmatmul.mubr.f32.gmra.mrb[0].mxu0 %v382
  %v450 = vpop.f32.mrb[0].mxu0
  %v451 = vadd.f32 0.0, %v450
  %v452 = vpop.f32.mrb[0].mxu0
  %453 = vdwg.mxu0
  %v454 = vrcp.pop %v378
  %v455 = vmul.f32 %v451, %v454
  %v456 = vld [vmem:[#allocation2] sm:$0x1]
  %458 = vset.pattern.permute.xlu0 0
  %459 = vperm.xlu0 %458, %v456
  %v460 = vpop.permute.xlu0 %459
  %v462 = vlaneseq
  %v463 = vshrl.u32 %v462, 7
  %v464 = vsub.s32 0, %v463
  %v465 = vrot.slane %v460, %v464
  %v466 = vadd.f32 %v455, %v465
  %467 = vst [vmem:[%s8] sm:$0x1] %v466
  // Predicated region
  $region34: #{trainable_kmeans_forward.1} parent=0 // pred_check
    _
  $region35: #{trainable_kmeans_forward.1} parent=0 // pred_check_branch
    %469 = sbr.rel (0) target = $region37
  $region36: #{trainable_kmeans_forward.1} parent=0 // pred_region
    _
  $region37: #{trainable_kmeans_forward.1} parent=0 // pred_fallthru
    _
  // Predicated region
  $region38: #{trainable_kmeans_forward.1} parent=0 // pred_check
    _
  $region39: #{trainable_kmeans_forward.1} parent=0 // pred_check_branch
    %471 = sbr.rel (0) target = $region41
  $region40: #{trainable_kmeans_forward.1} parent=0 // pred_region
    _
  $region41: #{trainable_kmeans_forward.1} parent=0 // pred_fallthru
    _

</llo_original>
